<compile_context>
chip_gen: v5e
topology: v5e:2x2
jax: 0.10.0
libtpu: 0.0.40
codegen_flags: <defaults>
</compile_context>

<pallas_src>
import functools

import jax
import jax.numpy as jnp
from jax import lax
from jax.experimental import pallas as pl
from jax.experimental.pallas import tpu as pltpu


_LANE = 128
_TM_MAX = 128                 # (128,128) f32 acc = 16 live vregs with register accumulation
_TK_ELEMS_MAX = 16384         # caps the static chunk unroll at 128 chunks / grid step
_BLOCK_BUDGET_BYTES = 8 * 1024 * 1024   # per input block (double-buffered by Pallas)


def _reduce_mean_kernel(x_ref, o_ref, acc_ref, *, k_total, tk, lane_dense):
    k_idx = pl.program_id(1)
    num_k = pl.num_programs(1)

    @pl.when(k_idx == 0)
    def _():
        acc_ref[...] = jnp.zeros_like(acc_ref)

    if lane_dense:
        # Lane-dense accumulation: per-128-lane chunks added on the VPU; the
        # cross-lane (XLU) reduce is deferred to the finalize step.
        nc = tk // _LANE
        num_k_static = pl.cdiv(k_total, tk)        # static Python int
        need_mask = (k_total % tk) != 0            # static Python bool

        def accumulate(masked):
            # Register accumulation: one acc_ref load + one store per grid
            # step; all chunk adds stay in vregs (no per-chunk VMEM RMW).
            acc = acc_ref[...]
            if masked:
                # Only ever executes for the last K step, whose element offset
                # is statically known -> fully static tail handling.
                k_start = (num_k_static - 1) * tk
                col = None
                for c in range(nc):                # static unroll
                    start = k_start + c * _LANE
                    if start >= k_total:
                        break                      # chunk fully out of bounds: skip
                    chunk = x_ref[:, c * _LANE:(c + 1) * _LANE].astype(jnp.float32)
                    if start + _LANE > k_total:    # the single ragged chunk
                        if col is None:            # built at most once per step
                            col = lax.broadcasted_iota(jnp.int32, chunk.shape, 1)
                        chunk = jnp.where(start + col < k_total, chunk, 0.0)
                    acc = acc + chunk
            else:
                for c in range(nc):                # static unroll, unmasked
                    acc = acc + x_ref[:, c * _LANE:(c + 1) * _LANE].astype(jnp.float32)
            acc_ref[...] = acc

        if need_mask:
            @pl.when(k_idx != num_k - 1)
            def _():
                accumulate(masked=False)

            @pl.when(k_idx == num_k - 1)
            def _():
                accumulate(masked=True)
        else:
            accumulate(masked=False)
    else:
        # Small-K path: K fits in one full-extent block (tk == k_total), so a
        # single per-row reduce per grid step is all there is (no masking).
        acc_ref[...] += jnp.sum(
            x_ref[...].astype(jnp.float32), axis=-1, keepdims=True
        )

    @pl.when(k_idx == num_k - 1)
    def _():
        total = jnp.sum(acc_ref[...], axis=-1, keepdims=True)   # one XLU reduce
        o_ref[...] = (total * (1.0 / k_total)).astype(o_ref.dtype)


def _vmem_limit_bytes(block_bytes):
    """Generation-gated scoped-VMEM request (headroom on v7x's 64 MiB/TC)."""
    try:
        vmem_cap = pltpu.get_tpu_info().vmem_capacity_bytes
    except Exception:  # conservative fallback when the query is unavailable
        vmem_cap = 64 * 1024 * 1024
    gen_cap = 48 * 1024 * 1024 if vmem_cap <= 64 * 1024 * 1024 else 64 * 1024 * 1024
    return min(gen_cap, max(32 * 1024 * 1024, 3 * block_bytes))


def _select_tiles(m, k, itemsize):
    sub = {4: 8, 2: 16, 1: 32}.get(itemsize, 8)   # sublane packing multiple

    # --- M tiles: multiple of the sublane packing, or full extent. A ragged
    # last M block is harmless: its garbage rows land in output rows that
    # Pallas clips when writing the partial output block.
    tm = m if m <= _TM_MAX else _TM_MAX
    # Guarantee >=2 M tiles when possible so the "parallel" axis can shard
    # across v7x's two TensorCores.
    if m > sub and pl.cdiv(m, tm) < 2:
        tm_half = ((((m + 1) // 2) + sub - 1) // sub) * sub
        if tm_half < m:
            tm = tm_half
    # TODO(synk): for M <= sublane-packing with huge K, split K across cores
    # with a small cross-core combine instead of leaving one TC idle on v7x.

    # --- K tiles: sized by a byte budget (not a fixed element count) so bf16 /
    # fp8 inputs get equally large DMA bursts; capped to bound the static
    # chunk unroll.  Multiple of 128 (ragged tail masked only on the last K
    # step) or full extent for small / awkward K.
    tk_cap = min(_TK_ELEMS_MAX, _BLOCK_BUDGET_BYTES // (tm * itemsize))
    tk_cap = max(_LANE, (tk_cap // _LANE) * _LANE)
    if k % _LANE == 0:
        tk = min(k, tk_cap)
        lane_dense = True
    elif k <= tk_cap:
        tk = k                      # full extent: one K step, per-row XLU sum
        lane_dense = False
    else:
        tk = tk_cap                 # multiple of 128; last K step masked
        lane_dense = True
    return tm, tk, lane_dense


def _reduce_mean_2d(x2d):
    """Mean over the last axis of a 2-D (M, K) array via a Pallas TPU kernel."""
    m, k = x2d.shape
    itemsize = x2d.dtype.itemsize
    tm, tk, lane_dense = _select_tiles(m, k, itemsize)
    grid = (pl.cdiv(m, tm), pl.cdiv(k, tk))
    acc_lanes = _LANE if lane_dense else 1
    block_bytes = tm * tk * itemsize

    kernel = functools.partial(
        _reduce_mean_kernel, k_total=k, tk=tk, lane_dense=lane_dense
    )

    out = pl.pallas_call(
        kernel,
        out_shape=jax.ShapeDtypeStruct((m, 1), x2d.dtype),
        grid_spec=pltpu.PrefetchScalarGridSpec(
            num_scalar_prefetch=0,
            grid=grid,
            in_specs=[pl.BlockSpec((tm, tk), lambda i, j: (i, j))],
            out_specs=pl.BlockSpec((tm, 1), lambda i, j: (i, 0)),
            scratch_shapes=[pltpu.VMEM((tm, acc_lanes), jnp.float32)],
        ),
        compiler_params=pltpu.CompilerParams(
            dimension_semantics=("parallel", "arbitrary"),
            vmem_limit_bytes=_vmem_limit_bytes(block_bytes),
        ),
        cost_estimate=pl.CostEstimate(
            flops=m * k,
            transcendentals=0,
            bytes_accessed=m * k * itemsize + m * itemsize,
        ),
    )(x2d)
    return out  # (M, 1)


def reduce_mean(x, axis, keepdims):
    """Equivalent of torch.mean(x, dim=axis, keepdim=keepdims)."""
    if not jnp.issubdtype(x.dtype, jnp.floating):
        raise TypeError(
            "reduce_mean: floating dtypes only (torch.mean errors on integer dtypes)."
        )
    axes = (axis,) if isinstance(axis, int) else tuple(axis)
    ndim = x.ndim
    axes = tuple(sorted(a % ndim for a in axes))
    kept = tuple(a for a in range(ndim) if a not in axes)

    kept_shape = tuple(x.shape[a] for a in kept)
    if keepdims:
        out_shape = tuple(1 if a in axes else x.shape[a] for a in range(ndim))
    else:
        out_shape = kept_shape

    m = 1
    for s in kept_shape:
        m *= s
    k = 1
    for a in axes:
        k *= x.shape[a]

    if k == 0:  # torch.mean over an empty reduction axis -> NaN
        return jnp.full(out_shape, jnp.nan, dtype=x.dtype)
    if m == 0:  # empty kept dims -> empty output
        return jnp.zeros(out_shape, dtype=x.dtype)

    perm = kept + axes
    if perm == tuple(range(ndim)):
        xt = x   # reduced axes already trailing (e.g. NCHW, axis=(2,3)): pure reshape
    else:
        # TODO(synk): fold non-trailing reduction axes into the BlockSpec
        # ((A, K, B) grid with lane-dense B) to avoid this extra HBM round-trip.
        xt = jnp.transpose(x, perm)

    out2d = _reduce_mean_2d(xt.reshape(m, k))    # (M, 1)
    return out2d.reshape(out_shape)


if __name__ == "__main__":
    # Module config: ReduceMean over the spatial dims of an NCHW tensor.
    axis = (2, 3)
    keepdims = True

    key = jax.random.PRNGKey(0)
    x = jax.random.normal(key, (2, 4, 16, 16), dtype=jnp.float32)

    out = reduce_mean(x, axis, keepdims)
    out = jax.block_until_ready(out)

    # Reference check against plain JAX (mirrors torch.mean semantics).
    ref = jnp.mean(x, axis=axis, keepdims=keepdims)
    assert out.shape == ref.shape, (out.shape, ref.shape)
    assert jnp.allclose(out, ref, atol=1e-5, rtol=1e-5)

    print("KERNEL_OK")
</pallas_src>

<mosaic_0001>
module attributes {stable_mosaic.version = 11 : i64} {
  func.func @_reduce_mean_kernel(%arg0: i32, %arg1: i32, %arg2: memref<8x256xf32, #tpu.memory_space<vmem>>, %arg3: memref<8x1xf32, #tpu.memory_space<vmem>>, %arg4: memref<8x128xf32, #tpu.memory_space<vmem>>) attributes {dimension_semantics = [#tpu.dimension_semantics<parallel>, #tpu.dimension_semantics<arbitrary>], iteration_bounds = array<i64: 1, 1>, scalar_prefetch = 0 : i64, scratch_operands = 1 : i64, tpu.core_type = #tpu.core_type<tc>, window_params = [{transform_indices = @transform_0, window_bounds = array<i64: 8, 256>}, {transform_indices = @transform_1, window_bounds = array<i64: 8, 1>}]} {
    %c0_i32 = arith.constant 0 : i32
    %0 = arith.cmpi eq, %arg1, %c0_i32 : i32
    %1 = arith.extui %0 : i1 to i32
    %c0_i32_0 = arith.constant 0 : i32
    %2 = arith.cmpi ne, %1, %c0_i32_0 : i32
    scf.if %2 {
      %cst = arith.constant 0.000000e+00 : f32
      %12 = vector.broadcast %cst : f32 to vector<8x128xf32>
      %c0_9 = arith.constant 0 : index
      %c0_10 = arith.constant 0 : index
      %13 = vector.load %arg4[%c0_9, %c0_10] : memref<8x128xf32, #tpu.memory_space<vmem>>, vector<8x128xf32>
      tpu.vector_store %arg4[%c0_9, %c0_10], %12 {strides = array<i32>} : memref<8x128xf32, #tpu.memory_space<vmem>>, vector<8x128xf32>,
    } else {
    }
    %c0 = arith.constant 0 : index
    %c0_1 = arith.constant 0 : index
    %3 = vector.load %arg4[%c0, %c0_1] : memref<8x128xf32, #tpu.memory_space<vmem>>, vector<8x128xf32>
    %c0_2 = arith.constant 0 : index
    %c0_3 = arith.constant 0 : index
    %4 = vector.load %arg2[%c0_2, %c0_3] : memref<8x256xf32, #tpu.memory_space<vmem>>, vector<8x128xf32>
    %5 = arith.addf %3, %4 : vector<8x128xf32>
    %c0_4 = arith.constant 0 : index
    %c128 = arith.constant 128 : index
    %6 = vector.load %arg2[%c0_4, %c128] : memref<8x256xf32, #tpu.memory_space<vmem>>, vector<8x128xf32>
    %7 = arith.addf %5, %6 : vector<8x128xf32>
    %c0_5 = arith.constant 0 : index
    %c0_6 = arith.constant 0 : index
    %8 = vector.load %arg4[%c0_5, %c0_6] : memref<8x128xf32, #tpu.memory_space<vmem>>, vector<8x128xf32>
    tpu.vector_store %arg4[%c0_5, %c0_6], %7 {strides = array<i32>} : memref<8x128xf32, #tpu.memory_space<vmem>>, vector<8x128xf32>,
    %c0_i32_7 = arith.constant 0 : i32
    %9 = arith.cmpi eq, %arg1, %c0_i32_7 : i32
    %10 = arith.extui %9 : i1 to i32
    %c0_i32_8 = arith.constant 0 : i32
    %11 = arith.cmpi ne, %10, %c0_i32_8 : i32
    scf.if %11 {
      %c0_9 = arith.constant 0 : index
      %c0_10 = arith.constant 0 : index
      %12 = vector.load %arg4[%c0_9, %c0_10] : memref<8x128xf32, #tpu.memory_space<vmem>>, vector<8x128xf32>
      %cst = arith.constant dense<0.000000e+00> : vector<8xf32>
      %13 = vector.multi_reduction <add>, %12, %cst [1] : vector<8x128xf32> to vector<8xf32>
      %14 = vector.shape_cast %13 : vector<8xf32> to vector<8x1xf32>
      %cst_11 = arith.constant 3.906250e-03 : f32
      %15 = vector.broadcast %cst_11 : f32 to vector<8x1xf32>
      %16 = arith.mulf %14, %15 : vector<8x1xf32>
      %c0_12 = arith.constant 0 : index
      %c0_13 = arith.constant 0 : index
      %17 = vector.load %arg3[%c0_12, %c0_13] : memref<8x1xf32, #tpu.memory_space<vmem>>, vector<8x1xf32>
      tpu.vector_store %arg3[%c0_12, %c0_13], %16 {strides = array<i32>} : memref<8x1xf32, #tpu.memory_space<vmem>>, vector<8x1xf32>,
    } else {
    }
    return
  }
  func.func @transform_0(%arg0: i32, %arg1: i32) -> (i32, i32) {
    %c0_i32 = arith.constant 0 : i32
    return %arg0, %arg1 : i32, i32
  }
  func.func @transform_1(%arg0: i32, %arg1: i32) -> (i32, i32) {
    %c0_i32 = arith.constant 0 : i32
    %c0_i32_0 = arith.constant 0 : i32
    return %arg0, %c0_i32 : i32, i32
  }
}

</mosaic_0001>

<llo_original>
// kernel: tpu_custom_call.1
$region0: #{tpu_custom_call.1}
  #allocation0 [shape = 'u32[]', space=smem, size = 0x4, offset = 0x4, fixed_abs, tag = 'smem constant byte address 0x4 - core index']
  #allocation1 [shape = 'u32[72,128]{1,0:T(1,128)}', space=vmem, size = 0x9000, scoped, tag = 'internal scratch']
  #allocation2 [shape = 'f32[8,128]{1,0:T(8,128)}', space=vmem, size = 0x1000, scoped, tag = 'scratch operand']
  %s0 = inlined_call_operand.hbm [shape: f32[8,256], index: 0, kind: input, shape index: {}]
  %s1 = inlined_call_operand.vmem [shape: f32[8,1], index: 1, kind: output, shape index: {}]
  %s2 = sld [smem:[#allocation0]]
  $region26: #{tpu_custom_call.1} parent=0
    _
  %s4 = ssub.s32 1, %s2
  %s5 = scalar_select 0, %s4, %s2
  $region1: #{tpu_custom_call.1} parent=0
    #allocation3 [shape = 'u8[8192]{0}', space=vmem, size = 0x2000, scoped, tag = 'input window, operand 0, single buffered']
    #allocation4 [shape = 's32[1]{0}', space=sflag, size = 0x4, scoped, tag = 'scoped memory for tpu_custom_call.1']
    %6 = vsyncpa [#allocation4], 0
    // Predicated region
    $region2: #{tpu_custom_call.1} parent=1 // pred_check
      _
    $region3: #{tpu_custom_call.1} parent=1 // pred_check_branch
      %8 = sbr.rel (0) target = $region5
    $region4: #{tpu_custom_call.1} parent=1 // pred_region
      %10 = vsyncadd [#allocation4], 0
      %s12 = sshll.u32 %s0, 4
      %s13 = int_to_ptr.hbm [resolvable:$true] %s12
      %s14 = sshll.u32 [#allocation3], 4
      %s15 = int_to_ptr.vmem [resolvable:$true] %s14
      %17 = dma.hbm_to_vmem [thread:$0]  %s13, 256, %s15, [#allocation4]
    $region5: #{tpu_custom_call.1} parent=1 // pred_fallthru
      _
    // Predicated region
    $region6: #{tpu_custom_call.1} parent=1 // pred_check
      _
    $region7: #{tpu_custom_call.1} parent=1 // pred_check_branch
      %19 = sbr.rel (0) target = $region9
    $region8: #{tpu_custom_call.1} parent=1 // pred_region
      %21 = dma.done [#allocation4], 256
    $region9: #{tpu_custom_call.1} parent=1 // pred_fallthru
      _
    %p22 = scmp.eq.s32.totalorder 0, 0
    // Predicated region
    $region10: #{tpu_custom_call.1} parent=1 // pred_check
      %p23 = pneg %p22
    $region11: #{tpu_custom_call.1} parent=1 // pred_check_branch
      %25 = sbr.rel (%p23) target = $region13
    $region12: #{tpu_custom_call.1} parent=1 // pred_region
      %26 = vst [vmem:[#allocation2] sm:$0xff] 0.0
    $region13: #{tpu_custom_call.1} parent=1 // pred_fallthru
      _
    %v27 = vld [vmem:[#allocation2] sm:$0xff]
    %v28 = vld [vmem:[#allocation3] sm:$0xff]
    %v29 = vadd.f32 %v27, %v28
    %v30 = vld [vmem:[#allocation3 + $0x8] sm:$0xff]
    %v31 = vadd.f32 %v29, %v30
    %32 = vst [vmem:[#allocation2] sm:$0xff] %v31
    // Predicated region
    $region14: #{tpu_custom_call.1} parent=1 // pred_check
      %p33 = pneg %p22
    $region15: #{tpu_custom_call.1} parent=1 // pred_check_branch
      %35 = sbr.rel (%p33) target = $region17
    $region16: #{tpu_custom_call.1} parent=1 // pred_region
      %v36 = vld [vmem:[#allocation2] sm:$0xff]
      %37 = vadd.xlane.f32.xlu0 %v36
      %v38 = vpop.xlane.xlu0 %37
      %v39 = vmul.f32 %v38, 0.00390625
      %vm40 = vcmask 7168
      %41 = vst.msk [vmem:[%s1] sm:$0xff] %vm40, %v39
    $region17: #{tpu_custom_call.1} parent=1 // pred_fallthru
      _
    // Predicated region
    $region18: #{tpu_custom_call.1} parent=1 // pred_check
      _
    $region19: #{tpu_custom_call.1} parent=1 // pred_check_branch
      %43 = sbr.rel (0) target = $region21
    $region20: #{tpu_custom_call.1} parent=1 // pred_region
      _
    $region21: #{tpu_custom_call.1} parent=1 // pred_fallthru
      _
    // Predicated region
    $region22: #{tpu_custom_call.1} parent=1 // pred_check
      _
    $region23: #{tpu_custom_call.1} parent=1 // pred_check_branch
      %45 = sbr.rel (0) target = $region25
    $region24: #{tpu_custom_call.1} parent=1 // pred_region
      _
    $region25: #{tpu_custom_call.1} parent=1 // pred_fallthru
      _
    %46 = vsyncpa [#allocation4], 1

</llo_original>
